<compile_context>
chip_gen: v6e
topology: v6e:2x2x1
jax: 0.10.0
libtpu: 0.0.40
codegen_flags: <defaults>
</compile_context>

<pallas_src>
import functools
import math

import jax
import jax.numpy as jnp
from jax.experimental import pallas as pl
from jax.experimental.pallas import tpu as pltpu


def _round_up(x, m):
    return (x + m - 1) // m * m


def _cdiv(a, b):
    return -(-a // b)


def _vmem_capacity_bytes():
    # Physical VMEM per TensorCore: 128 MiB on v5e/v6e, 64 MiB on v7x.
    try:
        return int(pltpu.get_tpu_info().vmem_capacity_bytes)
    except Exception:
        return 64 * 1024 * 1024  # conservative (v7x per-TC figure)


# ---------------------------------------------------------------------------
# Kernel 1: Lipschitz weight renormalization, one tiny launch per layer.
# Hoisted out of the per-batch-tile hot path; emits weights in (in, out)
# layout, zero-padded to 128-lane widths, in the MXU operand dtype.
# ---------------------------------------------------------------------------
def _renorm_kernel(c_ref, w_ref, o_ref):
    """c_ref: (1,) f32 SMEM   -- bound_c scalar
       w_ref: (K, N) f32 VMEM -- weight in (in, out) layout, zero-padded
       o_ref: (K, N) VMEM     -- renormalized weight in the compute dtype"""
    w = w_ref[...]
    # softplus(bound_c), numerically stable: max(c,0) + log(1 + exp(-|c|)).
    # Broadcast the SMEM scalar to a (1,1) vreg so exp/log run on the VPU/EUP.
    c = jnp.full((1, 1), c_ref[0], dtype=jnp.float32)
    sp_c = jnp.maximum(c, 0.0) + jnp.log(1.0 + jnp.exp(-jnp.abs(c)))   # (1, 1)
    # abs row-sum of the original (out, in) weight == abs column-sum here.
    abscolsum = jnp.sum(jnp.abs(w), axis=0, keepdims=True)             # (1, N)
    safe = jnp.maximum(abscolsum, jnp.float32(1e-30))
    scale = jnp.where(abscolsum > 0.0,
                      jnp.minimum(jnp.float32(1.0), sp_c / safe),
                      jnp.float32(1.0))                                 # padded cols stay 0
    o_ref[...] = (w * scale).astype(o_ref.dtype)


def _renorm_weight(w_pad, bound_c, compute_dtype, vmem_cap):
    k, n = w_pad.shape
    # Generous per-launch budget: input + output + a few f32 temporaries.
    need = 6 * k * n * 4 + (4 << 20)
    vmem_limit = int(min(max(need, 16 << 20), int(0.9 * vmem_cap)))
    return pl.pallas_call(
        _renorm_kernel,
        out_shape=jax.ShapeDtypeStruct((k, n), compute_dtype),
        in_specs=[
            pl.BlockSpec(memory_space=pltpu.MemorySpace.SMEM),   # bound_c scalar
            pl.BlockSpec(memory_space=pltpu.MemorySpace.VMEM),   # (K, N) weight
        ],
        out_specs=pl.BlockSpec(memory_space=pltpu.MemorySpace.VMEM),
        compiler_params=pltpu.CompilerParams(vmem_limit_bytes=vmem_limit),
    )(bound_c, w_pad)


# ---------------------------------------------------------------------------
# Kernel 2: fused MLP forward (all layers), gridded over the batch.
# Weights stay VMEM-resident (constant index_map, single-buffered); hidden
# activations never touch HBM; MXU matmuls accumulate in f32.
# ---------------------------------------------------------------------------
def _mlp_fused_kernel(x_ref, *refs, n_layers):
    """x_ref: (TB, K0) compute dtype; refs = (w_0, ..., w_{L-1}, o_ref).
       w_l: (K_l, N_l) compute dtype (in, out layout); o_ref: (TB, N_{L-1}) f32."""
    w_refs = refs[:n_layers]
    o_ref = refs[n_layers]
    cdt = x_ref.dtype
    # For the f32 operand path, force full-precision MXU passes so the strict
    # structural check against the f32 reference holds.
    prec = jax.lax.Precision.HIGHEST if cdt == jnp.float32 else None

    h = x_ref[...]
    y = None
    for l in range(n_layers):                                    # static unroll
        y = jax.lax.dot_general(
            h, w_refs[l][...],
            dimension_numbers=(((1,), (0,)), ((), ())),          # x @ w, no transpose
            preferred_element_type=jnp.float32,                  # f32 accumulation
            precision=prec)
        if l + 1 < n_layers:
            if cdt == jnp.float32:
                h = jnp.maximum(y, 0.0)
            else:
                # Cast before the ReLU: bf16 max halves VPU vreg traffic on
                # v6e/v7x; result is identical to max-then-cast.
                h = jnp.maximum(y.astype(cdt), 0)
    o_ref[...] = y.astype(o_ref.dtype)


def mlp_forward(x, params, *, compute_dtype=jnp.bfloat16, batch_tile=1024,
                out_dtype=jnp.float32):
    """Fused _MLP forward.

    params: list of (weight (out_features, in_features) f32, bound_c () f32),
    one per bias-free LipschitzLinear layer.  ReLU after every layer except
    the last, matching the PyTorch module.
    """
    x = jnp.asarray(x, jnp.float32)
    n, n_in = x.shape
    n_layers = len(params)
    assert n_layers >= 1
    n_out = params[-1][0].shape[0]
    cdt_size = jnp.dtype(compute_dtype).itemsize
    vmem_cap = _vmem_capacity_bytes()

    # Per-activation lane-dense widths: input padded only to round_up(n_in,128),
    # output only to round_up(n_out, 128), hidden widths to round_up(h, 128).
    feat_dims = [n_in] + [w.shape[0] for (w, _) in params]
    pad_dims = [_round_up(d, 128) for d in feat_dims]

    # --- Hoisted Lipschitz renorm: one small launch per layer. ---------------
    w_eff = []
    for l, (w, c) in enumerate(params):
        out_f, in_f = w.shape
        w_pad = jnp.zeros((pad_dims[l], pad_dims[l + 1]), jnp.float32)
        w_pad = w_pad.at[:in_f, :out_f].set(jnp.asarray(w, jnp.float32).T)
        c_arr = jnp.asarray(c, jnp.float32).reshape((1,))
        w_eff.append(_renorm_weight(w_pad, c_arr, compute_dtype, vmem_cap))

    # --- Batch tiling: balanced tiles; >=2 tiles when possible (v7x 2 TCs). --
    g = _cdiv(n, batch_tile)
    if n >= 32:
        g = max(g, 2)
    tb = _round_up(_cdiv(n, g), 16)
    g = _cdiv(n, tb)
    n_rows = g * tb
    x_p = jnp.zeros((n_rows, pad_dims[0]), dtype=compute_dtype)
    x_p = x_p.at[:n, :n_in].set(x.astype(compute_dtype))

    # --- VMEM budget from actual buffer sizes, clamped to the chip's VMEM. ---
    p_out = pad_dims[-1]
    p_hid_max = max(pad_dims[1:])
    weight_bytes = sum(pad_dims[l] * pad_dims[l + 1] for l in range(n_layers)) * cdt_size
    io_bytes = 2 * tb * pad_dims[0] * cdt_size + 2 * tb * p_out * jnp.dtype(out_dtype).itemsize
    act_bytes = tb * p_hid_max * (4 + cdt_size)          # transient hidden y / h
    need = weight_bytes + io_bytes + act_bytes + (4 << 20)
    vmem_limit = int(min(max(need, 16 << 20), int(0.75 * vmem_cap)))

    kernel = functools.partial(_mlp_fused_kernel, n_layers=n_layers)
    w_specs = [
        pl.BlockSpec((pad_dims[l], pad_dims[l + 1]), lambda i: (0, 0),
                     pipeline_mode=pl.Buffered(1))       # grid-invariant: no double buffer
        for l in range(n_layers)
    ]
    out_p = pl.pallas_call(
        kernel,
        out_shape=jax.ShapeDtypeStruct((n_rows, p_out), out_dtype),
        grid_spec=pltpu.PrefetchScalarGridSpec(
            num_scalar_prefetch=0,
            grid=(g,),
            in_specs=[pl.BlockSpec((tb, pad_dims[0]), lambda i: (i, 0))] + w_specs,
            out_specs=pl.BlockSpec((tb, p_out), lambda i: (i, 0)),   # lane-dense, narrow
        ),
        compiler_params=pltpu.CompilerParams(
            dimension_semantics=("parallel",),           # v7x: batch tiles across both TCs
            vmem_limit_bytes=vmem_limit,
        ),
    )(x_p, *w_eff)

    return out_p[:n, :n_out]


# ---------------------------------------------------------------------------
# Pure-JAX reference matching the PyTorch forward semantics.
# ---------------------------------------------------------------------------
def mlp_reference(x, params):
    h = x.astype(jnp.float32)
    n_layers = len(params)
    for i, (w, c) in enumerate(params):
        sp_c = jnp.logaddexp(jnp.float32(0.0), c)
        absrow = jnp.sum(jnp.abs(w), axis=1, keepdims=True)
        scale = jnp.minimum(1.0, sp_c / absrow)
        h = jnp.dot(h, (w * scale).T, precision=jax.lax.Precision.HIGHEST)
        if i < n_layers - 1:
            h = jnp.maximum(h, 0.0)
    return h


def init_params(key, n_input_dims, n_output_dims, n_neurons, n_hidden_layers):
    """Deterministic synthetic init mirroring _MLP.__init__ / LipschitzLinear."""
    dims = [(n_input_dims, n_neurons)]
    for _ in range(n_hidden_layers - 1):
        dims.append((n_neurons, n_neurons))
    dims.append((n_neurons, n_output_dims))

    params = []
    for (fan_in, fan_out) in dims:
        key, sub = jax.random.split(key)
        bound = math.sqrt(6.0 / fan_in)   # kaiming_uniform_, nonlinearity='relu'
        w = jax.random.uniform(sub, (fan_out, fan_in), dtype=jnp.float32,
                               minval=-bound, maxval=bound)
        # LipschitzLinear init sets bound_c = max_row sum|W| (renorm is then a
        # no-op); shrink it so the Lipschitz clipping branch is exercised here.
        bound_c = (0.5 * jnp.max(jnp.sum(jnp.abs(w), axis=1))).astype(jnp.float32)
        params.append((w, bound_c))
    return params


if __name__ == "__main__":
    # Small config consistent with the module: cfg = {'n_neurons': 32, 'n_hidden_layers': 3}
    batch = 16
    n_input_dims = 4
    n_output_dims = 3
    n_neurons = 32
    n_hidden_layers = 3

    key = jax.random.PRNGKey(0)
    key, xkey = jax.random.split(key)
    x = jax.random.normal(xkey, (batch, n_input_dims), dtype=jnp.float32)
    params = init_params(key, n_input_dims, n_output_dims, n_neurons, n_hidden_layers)

    ref = mlp_reference(x, params)

    # f32 operand path: strict structural/numerical check of the fused kernel.
    out_f32 = jax.block_until_ready(mlp_forward(x, params, compute_dtype=jnp.float32))
    assert out_f32.shape == (batch, n_output_dims)
    assert jnp.allclose(out_f32, ref, atol=1e-3, rtol=1e-3), "f32 path mismatch vs reference"

    # bf16 MXU-operand path (default / fast): loose tolerance for bf16 rounding.
    out_bf16 = jax.block_until_ready(mlp_forward(x, params))
    assert out_bf16.shape == (batch, n_output_dims)
    assert jnp.allclose(out_bf16, ref, atol=1e-1, rtol=1e-1), "bf16 path mismatch vs reference"

    print("KERNEL_OK")
</pallas_src>

<mosaic_0001>
module attributes {stable_mosaic.version = 11 : i64} {
  func.func @_renorm_kernel(%arg0: memref<1xf32, #tpu.memory_space<smem>>, %arg1: memref<128x128xf32, #tpu.memory_space<vmem>>, %arg2: memref<128x128xf32, #tpu.memory_space<vmem>>) attributes {dimension_semantics = [], scalar_prefetch = 0 : i64, scratch_operands = 0 : i64, tpu.core_type = #tpu.core_type<tc>} {
    %c0 = arith.constant 0 : index
    %c0_0 = arith.constant 0 : index
    %0 = vector.load %arg1[%c0, %c0_0] : memref<128x128xf32, #tpu.memory_space<vmem>>, vector<128x128xf32>
    %c0_1 = arith.constant 0 : index
    %1 = memref.load %arg0[%c0_1] : memref<1xf32, #tpu.memory_space<smem>>
    %2 = vector.broadcast %1 : f32 to vector<1x1xf32>
    %cst = arith.constant 0.000000e+00 : f32
    %3 = vector.broadcast %cst : f32 to vector<1x1xf32>
    %4 = arith.maximumf %2, %3 : vector<1x1xf32>
    %5 = math.absf %2 : vector<1x1xf32>
    %cst_2 = arith.constant 0.000000e+00 : f32
    %6 = vector.broadcast %cst_2 : f32 to vector<1x1xf32>
    %7 = arith.subf %6, %5 : vector<1x1xf32>
    %8 = math.exp %7 : vector<1x1xf32>
    %cst_3 = arith.constant 1.000000e+00 : f32
    %9 = vector.broadcast %cst_3 : f32 to vector<1x1xf32>
    %10 = arith.addf %9, %8 : vector<1x1xf32>
    %11 = math.log %10 : vector<1x1xf32>
    %12 = arith.addf %4, %11 : vector<1x1xf32>
    %13 = math.absf %0 : vector<128x128xf32>
    %cst_4 = arith.constant dense<0.000000e+00> : vector<128xf32>
    %14 = vector.multi_reduction <add>, %13, %cst_4 [0] : vector<128x128xf32> to vector<128xf32>
    %15 = vector.shape_cast %14 : vector<128xf32> to vector<1x128xf32>
    %cst_5 = arith.constant 1.000000e-30 : f32
    %16 = vector.broadcast %cst_5 : f32 to vector<1x128xf32>
    %17 = arith.maximumf %15, %16 : vector<1x128xf32>
    %cst_6 = arith.constant 0.000000e+00 : f32
    %18 = vector.broadcast %cst_6 : f32 to vector<1x128xf32>
    %19 = arith.cmpf ogt, %15, %18 : vector<1x128xf32>
    %20 = vector.broadcast %12 : vector<1x1xf32> to vector<1x128xf32>
    %21 = arith.divf %20, %17 : vector<1x128xf32>
    %cst_7 = arith.constant 1.000000e+00 : f32
    %22 = vector.broadcast %cst_7 : f32 to vector<1x128xf32>
    %23 = arith.minimumf %22, %21 : vector<1x128xf32>
    %cst_8 = arith.constant 1.000000e+00 : f32
    %24 = vector.broadcast %cst_8 : f32 to vector<1x128xf32>
    %25 = arith.select %19, %23, %24 : vector<1x128xi1>, vector<1x128xf32>
    %26 = vector.broadcast %25 : vector<1x128xf32> to vector<128x128xf32>
    %27 = arith.mulf %0, %26 : vector<128x128xf32>
    %c0_9 = arith.constant 0 : index
    %c0_10 = arith.constant 0 : index
    %28 = vector.load %arg2[%c0_9, %c0_10] : memref<128x128xf32, #tpu.memory_space<vmem>>, vector<128x128xf32>
    tpu.vector_store %arg2[%c0_9, %c0_10], %27 {strides = array<i32>} : memref<128x128xf32, #tpu.memory_space<vmem>>, vector<128x128xf32>,
    return
  }
}

</mosaic_0001>

<llo_original>
// kernel: tpu_custom_call.1
$region0: #{tpu_custom_call.1}
  #allocation0 [shape = 'u32[]', space=smem, size = 0x4, offset = 0x4, fixed_abs, tag = 'smem constant byte address 0x4 - core index']
  #allocation1 [shape = 'u32[144,128]{1,0:T(1,128)}', space=vmem, size = 0x12000, scoped, tag = 'internal scratch']
  #allocation2 [shape = 'f32[1]{0:T(128)S(6)}', space=smem, size = 0x200, scoped, tag = 'scoped memory for tpu_custom_call.1']
  %s0 = inlined_call_operand.<no memory space> [shape: f32[1], index: 0, kind: input, shape index: {}]
  %s1 = inlined_call_operand.hbm [shape: f32[128,128], index: 1, kind: input, shape index: {}]
  %s2 = inlined_call_operand.hbm [shape: f32[128,128], index: 2, kind: output, shape index: {}]
  %s3 = sld [smem:[#allocation0]]
  $region22: #{tpu_custom_call.1} parent=0
    _
  %s5 = ssub.s32 1, %s3
  %s6 = scalar_select 0, %s5, %s3
  %7 = sst [smem:[#allocation2]] %s0
  $region1: #{tpu_custom_call.1} parent=0
    #allocation3 [shape = 'u8[65536]{0}', space=vmem, size = 0x10000, scoped, tag = 'input window, operand 1, single buffered']
    #allocation4 [shape = 's32[1]{0}', space=sflag, size = 0x4, scoped, tag = 'scoped memory for tpu_custom_call.1']
    #allocation5 [shape = 's32[1]{0}', space=sflag, size = 0x4, scoped, tag = 'scoped memory for tpu_custom_call.1']
    #allocation6 [shape = 'u8[65536]{0}', space=vmem, size = 0x10000, scoped, tag = 'output window, operand 0, single buffered']
    %8 = vsyncpa [#allocation4], 0
    %9 = vsyncpa [#allocation5], 0
    // Predicated region
    $region2: #{tpu_custom_call.1} parent=1 // pred_check
      _
    $region3: #{tpu_custom_call.1} parent=1 // pred_check_branch
      %11 = sbr.rel (0) target = $region5
    $region4: #{tpu_custom_call.1} parent=1 // pred_region
      _
    $region5: #{tpu_custom_call.1} parent=1 // pred_fallthru
      _
    // Predicated region
    $region6: #{tpu_custom_call.1} parent=1 // pred_check
      _
    $region7: #{tpu_custom_call.1} parent=1 // pred_check_branch
      %13 = sbr.rel (0) target = $region9
    $region8: #{tpu_custom_call.1} parent=1 // pred_region
      %s15 = ssub.s32 2048, 2048
      %16 = vsyncadd [#allocation4], %s15
      %s17 = sshll.u32 [#allocation3], 4
      %s18 = int_to_ptr.vmem [resolvable:$true] %s17
      %23 = dma.hbm_to_vmem [thread:$0]  %s1, 2048, %s18, [#allocation4], 128, 128, 8
    $region9: #{tpu_custom_call.1} parent=1 // pred_fallthru
      _
    // Predicated region
    $region10: #{tpu_custom_call.1} parent=1 // pred_check
      _
    $region11: #{tpu_custom_call.1} parent=1 // pred_check_branch
      %25 = sbr.rel (0) target = $region13
    $region12: #{tpu_custom_call.1} parent=1 // pred_region
      %26 = dma.done [#allocation4], 2048
    $region13: #{tpu_custom_call.1} parent=1 // pred_fallthru
      _
    %v27 = vld [vmem:[#allocation3] sm:$0xff]
    %v28 = vld [vmem:[#allocation3 + $0x8] sm:$0xff]
    %v29 = vld [vmem:[#allocation3 + $0x10] sm:$0xff]
    %v30 = vld [vmem:[#allocation3 + $0x18] sm:$0xff]
    %v31 = vld [vmem:[#allocation3 + $0x20] sm:$0xff]
    %v32 = vld [vmem:[#allocation3 + $0x28] sm:$0xff]
    %v33 = vld [vmem:[#allocation3 + $0x30] sm:$0xff]
    %v34 = vld [vmem:[#allocation3 + $0x38] sm:$0xff]
    %v35 = vld [vmem:[#allocation3 + $0x40] sm:$0xff]
    %v36 = vld [vmem:[#allocation3 + $0x48] sm:$0xff]
    %v37 = vld [vmem:[#allocation3 + $0x50] sm:$0xff]
    %v38 = vld [vmem:[#allocation3 + $0x58] sm:$0xff]
    %v39 = vld [vmem:[#allocation3 + $0x60] sm:$0xff]
    %v40 = vld [vmem:[#allocation3 + $0x68] sm:$0xff]
    %v41 = vld [vmem:[#allocation3 + $0x70] sm:$0xff]
    %v42 = vld [vmem:[#allocation3 + $0x78] sm:$0xff]
    %s43 = sld [smem:[#allocation2]]
    %v44 = vstv %s43
    %v45 = vmax.f32 %v44, 0.0
    %v46 = vand.u32 2147483647, %v44
    %v47 = vsub.f32 0.0, %v46
    %v48 = vmul.f32 %v47, 1.442695
    %v49 = vpow.pop %v48
    %v50 = vadd.f32 %v49, 1.0
    %v51 = vlog2.pop %v50
    %v52 = vmul.f32 %v51, 0.6931472
    %v53 = vadd.f32 %v45, %v52
    %v54 = vand.u32 2147483647, %v27
    %v55 = vand.u32 2147483647, %v28
    %v56 = vand.u32 2147483647, %v29
    %v57 = vand.u32 2147483647, %v30
    %v58 = vand.u32 2147483647, %v31
    %v59 = vand.u32 2147483647, %v32
    %v60 = vand.u32 2147483647, %v33
    %v61 = vand.u32 2147483647, %v34
    %v62 = vand.u32 2147483647, %v35
    %v63 = vand.u32 2147483647, %v36
    %v64 = vand.u32 2147483647, %v37
    %v65 = vand.u32 2147483647, %v38
    %v66 = vand.u32 2147483647, %v39
    %v67 = vand.u32 2147483647, %v40
    %v68 = vand.u32 2147483647, %v41
    %v69 = vand.u32 2147483647, %v42
    %v70 = vadd.f32 %v54, %v55
    %v71 = vadd.f32 %v70, %v56
    %v72 = vadd.f32 %v71, %v57
    %v73 = vadd.f32 %v72, %v58
    %v74 = vadd.f32 %v73, %v59
    %v75 = vadd.f32 %v74, %v60
    %v76 = vadd.f32 %v75, %v61
    %v77 = vadd.f32 %v76, %v62
    %v78 = vadd.f32 %v77, %v63
    %v79 = vadd.f32 %v78, %v64
    %v80 = vadd.f32 %v79, %v65
    %v81 = vadd.f32 %v80, %v66
    %v82 = vadd.f32 %v81, %v67
    %v83 = vadd.f32 %v82, %v68
    %v84 = vadd.f32 %v83, %v69
    %v85 = vrot.slane %v84, 4
    %v86 = vadd.f32 %v84, %v85
    %v87 = vrot.slane %v86, 2
    %v88 = vadd.f32 %v86, %v87
    %v89 = vrot.slane %v88, 1
    %v90 = vadd.f32 %v88, %v89
    %v91 = vmax.f32 %v90, 1e-30
    %vm92 = vcmp.gt.f32.partialorder %v90, 0.0
    %v93 = vrcp.pop %v91
    %v94 = vmul.f32 %v53, %v93
    %v95 = vmin.f32 %v94, 1.0
    %v96 = vsel %vm92, %v95, 1.0
    %v97 = vmul.f32 %v27, %v96
    %v98 = vmul.f32 %v28, %v96
    %v99 = vmul.f32 %v29, %v96
    %v100 = vmul.f32 %v30, %v96
    %v101 = vmul.f32 %v31, %v96
    %v102 = vmul.f32 %v32, %v96
    %v103 = vmul.f32 %v33, %v96
    %v104 = vmul.f32 %v34, %v96
    %v105 = vmul.f32 %v35, %v96
    %v106 = vmul.f32 %v36, %v96
    %v107 = vmul.f32 %v37, %v96
    %v108 = vmul.f32 %v38, %v96
    %v109 = vmul.f32 %v39, %v96
    %v110 = vmul.f32 %v40, %v96
    %v111 = vmul.f32 %v41, %v96
    %v112 = vmul.f32 %v42, %v96
    %113 = vst [vmem:[#allocation6] sm:$0xff] %v97
    %114 = vst [vmem:[#allocation6 + $0x8] sm:$0xff] %v98
    %115 = vst [vmem:[#allocation6 + $0x10] sm:$0xff] %v99
    %116 = vst [vmem:[#allocation6 + $0x18] sm:$0xff] %v100
    %117 = vst [vmem:[#allocation6 + $0x20] sm:$0xff] %v101
    %118 = vst [vmem:[#allocation6 + $0x28] sm:$0xff] %v102
    %119 = vst [vmem:[#allocation6 + $0x30] sm:$0xff] %v103
    %120 = vst [vmem:[#allocation6 + $0x38] sm:$0xff] %v104
    %121 = vst [vmem:[#allocation6 + $0x40] sm:$0xff] %v105
    %122 = vst [vmem:[#allocation6 + $0x48] sm:$0xff] %v106
    %123 = vst [vmem:[#allocation6 + $0x50] sm:$0xff] %v107
    %124 = vst [vmem:[#allocation6 + $0x58] sm:$0xff] %v108
    %125 = vst [vmem:[#allocation6 + $0x60] sm:$0xff] %v109
    %126 = vst [vmem:[#allocation6 + $0x68] sm:$0xff] %v110
    %127 = vst [vmem:[#allocation6 + $0x70] sm:$0xff] %v111
    %128 = vst [vmem:[#allocation6 + $0x78] sm:$0xff] %v112
    // Predicated region
    $region14: #{tpu_custom_call.1} parent=1 // pred_check
      _
    $region15: #{tpu_custom_call.1} parent=1 // pred_check_branch
      %130 = sbr.rel (0) target = $region17
    $region16: #{tpu_custom_call.1} parent=1 // pred_region
      %s132 = ssub.s32 2048, 2048
      %133 = vsyncadd [#allocation5], %s132
      %s134 = sshll.u32 [#allocation6], 4
      %s135 = int_to_ptr.vmem [resolvable:$true] %s134
      %140 = dma.vmem_to_hbm [thread:$0]  %s135, 2048, %s2, [#allocation5], 128, 128, 8
    $region17: #{tpu_custom_call.1} parent=1 // pred_fallthru
      _
    // Predicated region
    $region18: #{tpu_custom_call.1} parent=1 // pred_check
      _
    $region19: #{tpu_custom_call.1} parent=1 // pred_check_branch
      %142 = sbr.rel (0) target = $region21
    $region20: #{tpu_custom_call.1} parent=1 // pred_region
      %143 = dma.done [#allocation5], 2048
    $region21: #{tpu_custom_call.1} parent=1 // pred_fallthru
      _
    %144 = vsyncpa [#allocation4], 1
    %145 = vsyncpa [#allocation5], 1

</llo_original>
